<compile_context>
chip_gen: v7x
topology: tpu7x:2x2x1
jax: 0.10.0
libtpu: 0.0.40
codegen_flags: <defaults>
</compile_context>

<pallas_src>
import functools

import jax
import jax.numpy as jnp
from jax.experimental import pallas as pl
from jax.experimental.pallas import tpu as pltpu


def pooled_embed_kernel(p_ref, w_ref, b_ref, o_ref):
    # p_ref: (tb, K)  bf16 patch-mean features for tb images (K ordered (c, p1, p2))
    # w_ref: (K, tn)  bf16 folded / D-padded patch-embedding weight tile
    # b_ref: (1, tn)  f32 bias tile
    # o_ref: (tb, tn) f32 mean-pooled embeddings (lane-dense, tn % 128 == 0)
    acc = jnp.dot(p_ref[...], w_ref[...], preferred_element_type=jnp.float32)  # MXU, f32 accum
    o_ref[...] = (acc + b_ref[...]).astype(o_ref.dtype)                        # bias added once per image


def _round_up(x: int, m: int) -> int:
    return ((x + m - 1) // m) * m


def _batch_tile(B: int) -> int:
    """Largest sublane-aligned batch tile that still yields >= 2 grid steps."""
    for cand in (512, 256, 128, 64, 32, 16, 8):
        if B >= 2 * cand:
            return cand
    return 8  # tiny batches get padded up to 2 steps of 8


def _d_tile(K: int, Dp: int) -> int:
    """Embedding-dim tile: keep the resident bf16 (K, tn) weight tile <= ~8 MiB."""
    if K * Dp * 2 <= (8 << 20):
        return Dp
    for tn in (2048, 1024, 512, 256, 128):
        if Dp % tn == 0 and K * tn * 2 <= (8 << 20):
            return tn
    return 128


def _const_block_spec(shape, index_map):
    # Constant-index operands are fetched once; request a single VMEM buffer
    # instead of the default double buffer. Fall back if this Pallas version
    # does not accept pipeline_mode.
    try:
        return pl.BlockSpec(shape, index_map, pipeline_mode=pl.Buffered(1))
    except Exception:
        return pl.BlockSpec(shape, index_map)


def _pool_matrices(H: int, W: int, P: int):
    """S_h (P, H), S_w (P, W): patch-grid averaging expressed as constant matmuls."""
    h, w = H // P, W // P
    sh = jnp.where(jnp.arange(H)[None, :] % P == jnp.arange(P)[:, None],
                   1.0 / h, 0.0).astype(jnp.float32)
    sw = jnp.where(jnp.arange(W)[None, :] % P == jnp.arange(P)[:, None],
                   1.0 / w, 0.0).astype(jnp.float32)
    return sh, sw


def patch_mean(images: jnp.ndarray, patch_size: int) -> jnp.ndarray:
    """NCHW images -> (B, C*P*P) mean over the patch grid, K ordered (c, p1, p2).

    Expressed as two constant pooling GEMMs (S_h @ img @ S_w^T) so XLA streams
    the image through the MXU at HBM roofline instead of a 6-D strided reduce.
    """
    B, C, H, W = images.shape
    P = patch_size
    sh, sw = _pool_matrices(H, W, P)
    x = images.astype(jnp.float32)
    t = jnp.einsum('bcij,qj->bciq', x, sw, precision=jax.lax.Precision.HIGHEST)       # (B,C,H,P)
    pooled4 = jnp.einsum('pi,bciq->bcpq', sh, t, precision=jax.lax.Precision.HIGHEST)  # (B,C,P,P)
    return pooled4.reshape(B, C * P * P)  # contiguous merge, free


def fold_patch_embed_params(weight, bias, patch_size: int, channels: int, d_pad: int):
    """Reorder Linear weight rows (p1 p2 c) -> (c p1 p2), pad D to d_pad, cast bf16.

    One-time weight-sized transform (would be folded into parameters in a real
    deployment) -- keeps permutation/padding off the activation path.
    """
    K, D = weight.shape
    P = patch_size
    w = weight.reshape(P, P, channels, D)            # (p1, p2, c, D)
    w = jnp.transpose(w, (2, 0, 1, 3)).reshape(channels * P * P, D)
    if d_pad > D:
        w = jnp.pad(w, ((0, 0), (0, d_pad - D)))
        bias = jnp.pad(bias, (0, d_pad - D))
    return w.astype(jnp.bfloat16), bias.reshape(1, d_pad).astype(jnp.float32)


@functools.partial(jax.jit, static_argnames=("patch_size",))
def vision_forward(images: jnp.ndarray, weight: jnp.ndarray, bias: jnp.ndarray,
                   patch_size: int) -> jnp.ndarray:
    B, C, H, W = images.shape
    K, D = weight.shape
    P = patch_size

    # Lane-dense embedding dim (multiple of 128); zero columns sliced off at the end.
    Dp = _round_up(max(D, 128), 128)
    w_bf, bias_p = fold_patch_embed_params(weight, bias, P, C, Dp)

    pooled = patch_mean(images, P)                   # (B, K) f32

    # Batch tiling: sublane-aligned tb, >= 2 grid steps, even step count (v7x dual-TC).
    tb = _batch_tile(B)
    grid_b = max(2, pl.cdiv(B, tb))
    if grid_b % 2:
        grid_b += 1
    Bp = grid_b * tb
    if Bp != B:
        pooled = jnp.pad(pooled, ((0, Bp - B), (0, 0)))
    pooled_bf = pooled.astype(jnp.bfloat16)          # halve DMA/VMEM bytes; f32 accum in kernel

    # Embedding-dim tiling (only kicks in when the weight would crowd VMEM).
    tn = _d_tile(K, Dp)
    grid_d = Dp // tn

    if grid_d == 1:
        # weight/bias are grid-invariant: single VMEM buffer each
        w_spec = _const_block_spec((K, tn), lambda i, j: (0, j))
        b_spec = _const_block_spec((1, tn), lambda i, j: (0, j))
        w_bufs = 1
    else:
        w_spec = pl.BlockSpec((K, tn), lambda i, j: (0, j))
        b_spec = pl.BlockSpec((1, tn), lambda i, j: (0, j))
        w_bufs = 2

    # Explicit scoped-VMEM budget (v5e default is only 16 MiB; v7x physical is 64 MiB).
    vmem_need = (w_bufs * K * tn * 2      # weight tile(s), bf16
                 + 2 * tb * K * 2         # double-buffered pooled tile, bf16
                 + 2 * tb * tn * 4        # double-buffered output tile, f32
                 + 2 * tn * 4)            # bias
    vmem_limit = int(min(max(2 * vmem_need + (4 << 20), 32 << 20), 64 << 20))

    cost = pl.CostEstimate(
        flops=2 * Bp * K * Dp,
        transcendentals=0,
        bytes_accessed=Bp * K * 2 + K * Dp * 2 + Dp * 4 + Bp * Dp * 4,
    )

    out = pl.pallas_call(
        pooled_embed_kernel,
        out_shape=jax.ShapeDtypeStruct((Bp, Dp), jnp.float32),
        grid_spec=pltpu.PrefetchScalarGridSpec(
            num_scalar_prefetch=0,
            grid=(grid_b, grid_d),
            in_specs=[
                pl.BlockSpec((tb, K), lambda i, j: (i, 0)),   # pooled batch tile
                w_spec,                                       # weight tile (resident)
                b_spec,                                       # bias tile (resident)
            ],
            out_specs=pl.BlockSpec((tb, tn), lambda i, j: (i, j)),
        ),
        compiler_params=pltpu.CompilerParams(
            dimension_semantics=("parallel", "parallel"),
            vmem_limit_bytes=vmem_limit,
        ),
        cost_estimate=cost,
    )(pooled_bf, w_bf, bias_p)

    return out[:B, :D]


def vision_reference(images, weight, bias, patch_size):
    """Original per-token path: patchify -> Linear -> mean over tokens (f32)."""
    B, C, H, W = images.shape
    P = patch_size
    h, w = H // P, W // P
    x = images.reshape(B, C, h, P, w, P)
    x = jnp.transpose(x, (0, 2, 4, 3, 5, 1))                 # b h w p1 p2 c
    patches = x.reshape(B, h * w, P * P * C)                 # (B, N, K)
    tokens = jnp.einsum("bnk,kd->bnd", patches, weight,
                        precision=jax.lax.Precision.HIGHEST) + bias
    return jnp.mean(tokens, axis=1)


if __name__ == "__main__":
    # Small shapes consistent with the module: batch=2, channels=4, spatial=16
    B, C, H, W = 2, 4, 16, 16
    PATCH = 8
    D = 32
    K = PATCH * PATCH * C

    key = jax.random.PRNGKey(0)
    k_img, k_w, k_b = jax.random.split(key, 3)
    images = jax.random.normal(k_img, (B, C, H, W), dtype=jnp.float32)

    # Deterministic parameter init (patch-embedding Linear(K -> D))
    weight = 0.02 * jax.random.normal(k_w, (K, D), dtype=jnp.float32)
    bias = 0.01 * jax.random.normal(k_b, (D,), dtype=jnp.float32)

    out = vision_forward(images, weight, bias, PATCH)
    out = jax.block_until_ready(out)

    ref = vision_reference(images, weight, bias, PATCH)
    assert out.shape == (B, D)
    max_err = float(jnp.max(jnp.abs(out - ref)))
    # bf16 activations/weights (f32 accumulation): tolerance loosened vs pure-f32 path.
    assert jnp.allclose(out, ref, atol=2e-2, rtol=2e-2), max_err

    print("KERNEL_OK")
</pallas_src>

<mosaic_0001>
module attributes {stable_mosaic.version = 11 : i64} {
  func.func @pooled_embed_kernel(%arg0: i32, %arg1: i32, %arg2: memref<8x256xbf16, #tpu.memory_space<vmem>>, %arg3: memref<256x128xbf16, #tpu.memory_space<vmem>>, %arg4: memref<1x128xf32, #tpu.memory_space<vmem>>, %arg5: memref<8x128xf32, #tpu.memory_space<vmem>>) attributes {dimension_semantics = [#tpu.dimension_semantics<parallel>, #tpu.dimension_semantics<parallel>], iteration_bounds = array<i64: 2, 1>, scalar_prefetch = 0 : i64, scratch_operands = 0 : i64, tpu.core_type = #tpu.core_type<tc>, window_params = [{transform_indices = @transform_0, window_bounds = array<i64: 8, 256>}, {pipeline_mode = #tpu.pipeline_mode<synchronous>, transform_indices = @transform_1, window_bounds = array<i64: 256, 128>}, {pipeline_mode = #tpu.pipeline_mode<synchronous>, transform_indices = @transform_2, window_bounds = array<i64: 1, 128>}, {transform_indices = @transform_3, window_bounds = array<i64: 8, 128>}]} {
    %c0 = arith.constant 0 : index
    %c0_0 = arith.constant 0 : index
    %0 = vector.load %arg2[%c0, %c0_0] : memref<8x256xbf16, #tpu.memory_space<vmem>>, vector<8x256xbf16>
    %c0_1 = arith.constant 0 : index
    %c0_2 = arith.constant 0 : index
    %1 = vector.load %arg3[%c0_1, %c0_2] : memref<256x128xbf16, #tpu.memory_space<vmem>>, vector<256x128xbf16>
    %cst = arith.constant dense<0.000000e+00> : vector<8x128xf32>
    %2 = tpu.matmul %0, %1, %cst {dimension_numbers = #tpu.dot_dimension_numbers<[1], [0], [0], [1], [0, 0, 1, 1], [], []>} : vector<8x256xbf16>, vector<256x128xbf16>, vector<8x128xf32> -> vector<8x128xf32>
    %c0_3 = arith.constant 0 : index
    %c0_4 = arith.constant 0 : index
    %3 = vector.load %arg4[%c0_3, %c0_4] : memref<1x128xf32, #tpu.memory_space<vmem>>, vector<1x128xf32>
    %4 = vector.broadcast %3 : vector<1x128xf32> to vector<8x128xf32>
    %5 = arith.addf %2, %4 : vector<8x128xf32>
    %c0_5 = arith.constant 0 : index
    %c0_6 = arith.constant 0 : index
    %6 = vector.load %arg5[%c0_5, %c0_6] : memref<8x128xf32, #tpu.memory_space<vmem>>, vector<8x128xf32>
    tpu.vector_store %arg5[%c0_5, %c0_6], %5 {strides = array<i32>} : memref<8x128xf32, #tpu.memory_space<vmem>>, vector<8x128xf32>,
    return
  }
  func.func @transform_0(%arg0: i32, %arg1: i32) -> (i32, i32) {
    %c0_i32 = arith.constant 0 : i32
    %c0_i32_0 = arith.constant 0 : i32
    return %arg0, %c0_i32 : i32, i32
  }
  func.func @transform_1(%arg0: i32, %arg1: i32) -> (i32, i32) {
    %c0_i32 = arith.constant 0 : i32
    %c0_i32_0 = arith.constant 0 : i32
    return %c0_i32, %arg1 : i32, i32
  }
  func.func @transform_2(%arg0: i32, %arg1: i32) -> (i32, i32) {
    %c0_i32 = arith.constant 0 : i32
    %c0_i32_0 = arith.constant 0 : i32
    return %c0_i32, %arg1 : i32, i32
  }
  func.func @transform_3(%arg0: i32, %arg1: i32) -> (i32, i32) {
    %c0_i32 = arith.constant 0 : i32
    return %arg0, %arg1 : i32, i32
  }
}

</mosaic_0001>

<llo_original>
// kernel: vision_forward.1
$region0: #{vision_forward.1}
  #allocation0 [shape = 'u32[]', space=smem, size = 0x4, offset = 0x4, fixed_abs, tag = 'smem constant byte address 0x4 - core index']
  #allocation1 [shape = 'u32[144,128]{1,0:T(1,128)}', space=vmem, size = 0x12000, scoped, tag = 'internal scratch']
  %s0 = inlined_call_operand.vmem [shape: bf16[16,256], index: 0, kind: input, shape index: {}]
  %s1 = inlined_call_operand.vmem [shape: bf16[256,128], index: 1, kind: input, shape index: {}]
  %s2 = inlined_call_operand.vmem [shape: f32[1,128], index: 2, kind: input, shape index: {}]
  %s3 = inlined_call_operand.vmem [shape: f32[16,128], index: 3, kind: output, shape index: {}]
  %s4 = sld [smem:[#allocation0]]
  $region45: #{vision_forward.1} parent=0
    _
  %s6 = ssub.s32 1, %s4
  %s7 = scalar_select 0, %s6, %s4
  loop: start=0, step=1, limit=4
  $region2: #{vision_forward.1} parent=0 // loop_pre_header
    _
  $region3: #{vision_forward.1} parent=0 // loop_header
    %s9 = sphi 0, %s13
    %p10 = scmp.ge.s32.totalorder %s9, 4
    %s16 = sphi 0, %s28
    %s17 = sphi 0, %s24
    %s18 = sphi 0, %s16
    %s19 = sphi 0, %s17
    %s20 = sphi 0, %s18
    %s21 = sphi 0, %s19
    %s31 = sphi 0, %s33
    %s34 = sphi 0, %s31
    %s35 = sphi 0, %s34
    %s51 = sphi 0, %s35
    %s57 = sphi 0, %s59
    %s60 = sphi 0, %s57
    %s61 = sphi 0, %s60
    %s77 = sphi 0, %s61
    %s83 = sphi 0, %s85
    %s86 = sphi 0, %s83
    %s87 = sphi 0, %s86
    %s103 = sphi 0, %s87
    %s111 = sphi 0, %s113
    %s114 = sphi 0, %s111
    %s115 = sphi 0, %s114
    %s131 = sphi 0, %s115
  $region4: #{vision_forward.1} parent=0 // loop_header_branch
    %12 = sbr.rel (%p10) target = $region8
  $region5: #{vision_forward.1} parent=0 // loop_body
    %s14 = ssub.s32 %s9, 1
    %s15 = ssub.s32 %s9, 2
    %s22 = sadd.s32 1, %s17
    %p23 = scmp.ge.s32.totalorder %s22, 1
    %s24 = scalar_select %p23, 0, %s22
    %s25 = sadd.s32 1, %s16
    %s26 = scalar_select %p23, %s25, %s16
    %p27 = scmp.ge.s32.totalorder %s26, 2
    %s28 = scalar_select %p27, 0, %s26
    %s29 = ssub.s32 %s16, %s28
    %p30 = scmp.eq.s32.totalorder %s29, 0
    %s32 = sadd.s32 %s31, 1
    %s33 = scalar_select %p30, %s31, %s32
    %p36 = pneg %p30
    %p37 = scmp.eq.s32.totalorder %s9, 1
    %p38 = por %p36, %p37
    %p39 = scmp.ne.s32.totalorder %s31, %s34
    %p40 = scmp.eq.s32.totalorder %s9, 0
    %p41 = por %p39, %p40
    %p42 = scmp.ne.s32.totalorder %s31, %s34
    %p43 = scmp.eq.s32.totalorder %s14, 1
    %p44 = por %p42, %p43
    %p45 = scmp.ne.s32.totalorder %s34, %s35
    %p46 = scmp.eq.s32.totalorder %s14, 0
    %p47 = por %p45, %p46
    %p48 = scmp.ne.s32.totalorder %s34, %s35
    %p49 = scmp.eq.s32.totalorder %s15, 1
    %p50 = por %p48, %p49
    %p52 = scmp.ne.s32.totalorder %s35, %s51
    %p53 = scmp.eq.s32.totalorder %s15, 0
    %p54 = por %p52, %p53
    %s55 = ssub.s32 %s17, %s24
    %p56 = scmp.eq.s32.totalorder %s55, 0
    %s58 = sadd.s32 %s57, 1
    %s59 = scalar_select %p56, %s57, %s58
    %p62 = pneg %p56
    %p63 = scmp.eq.s32.totalorder %s9, 1
    %p64 = por %p62, %p63
    %p65 = scmp.ne.s32.totalorder %s57, %s60
    %p66 = scmp.eq.s32.totalorder %s9, 0
    %p67 = por %p65, %p66
    %p68 = scmp.ne.s32.totalorder %s57, %s60
    %p69 = scmp.eq.s32.totalorder %s14, 1
    %p70 = por %p68, %p69
    %p71 = scmp.ne.s32.totalorder %s60, %s61
    %p72 = scmp.eq.s32.totalorder %s14, 0
    %p73 = por %p71, %p72
    %p74 = scmp.ne.s32.totalorder %s60, %s61
    %p75 = scmp.eq.s32.totalorder %s15, 1
    %p76 = por %p74, %p75
    %p78 = scmp.ne.s32.totalorder %s61, %s77
    %p79 = scmp.eq.s32.totalorder %s15, 0
    %p80 = por %p78, %p79
    %s81 = ssub.s32 %s17, %s24
    %p82 = scmp.eq.s32.totalorder %s81, 0
    %s84 = sadd.s32 %s83, 1
    %s85 = scalar_select %p82, %s83, %s84
    %p88 = pneg %p82
    %p89 = scmp.eq.s32.totalorder %s9, 1
    %p90 = por %p88, %p89
    %p91 = scmp.ne.s32.totalorder %s83, %s86
    %p92 = scmp.eq.s32.totalorder %s9, 0
    %p93 = por %p91, %p92
    %p94 = scmp.ne.s32.totalorder %s83, %s86
    %p95 = scmp.eq.s32.totalorder %s14, 1
    %p96 = por %p94, %p95
    %p97 = scmp.ne.s32.totalorder %s86, %s87
    %p98 = scmp.eq.s32.totalorder %s14, 0
    %p99 = por %p97, %p98
    %p100 = scmp.ne.s32.totalorder %s86, %s87
    %p101 = scmp.eq.s32.totalorder %s15, 1
    %p102 = por %p100, %p101
    %p104 = scmp.ne.s32.totalorder %s87, %s103
    %p105 = scmp.eq.s32.totalorder %s15, 0
    %p106 = por %p104, %p105
    %s107 = ssub.s32 %s16, %s28
    %s108 = ssub.s32 %s17, %s24
    %s109 = sor.u32 %s107, %s108
    %p110 = scmp.eq.s32.totalorder %s109, 0
    %s112 = sadd.s32 %s111, 1
    %s113 = scalar_select %p110, %s111, %s112
    %p116 = pneg %p110
    %p117 = scmp.eq.s32.totalorder %s9, 1
    %p118 = por %p116, %p117
    %p119 = scmp.ne.s32.totalorder %s111, %s114
    %p120 = scmp.eq.s32.totalorder %s9, 0
    %p121 = por %p119, %p120
    %p122 = scmp.ne.s32.totalorder %s111, %s114
    %p123 = scmp.eq.s32.totalorder %s14, 1
    %p124 = por %p122, %p123
    %p125 = scmp.ne.s32.totalorder %s114, %s115
    %p126 = scmp.eq.s32.totalorder %s14, 0
    %p127 = por %p125, %p126
    %p128 = scmp.ne.s32.totalorder %s114, %s115
    %p129 = scmp.eq.s32.totalorder %s15, 1
    %p130 = por %p128, %p129
    %p132 = scmp.ne.s32.totalorder %s115, %s131
    %p133 = scmp.eq.s32.totalorder %s15, 0
    %p134 = por %p132, %p133
    %p135 = scmp.le.s32.totalorder 1, %s9
    %p136 = scmp.lt.s32.totalorder %s9, 3
    %p137 = pnand %p135, %p136
    %p138 = pneg %p137
    // Predicated region
    $region9: #{vision_forward.1} parent=5 // pred_check
      _
    $region10: #{vision_forward.1} parent=5 // pred_check_branch
      %140 = sbr.rel (%p137) target = $region12
    $region11: #{vision_forward.1} parent=5 // pred_region
      %s141 = ssub.s32 %s9, 1
      // Predicated region
      $region13: #{vision_forward.1} parent=11 // pred_check
        %p142 = pneg %p73
      $region14: #{vision_forward.1} parent=11 // pred_check_branch
        %144 = sbr.rel (%p142) target = $region16
      $region15: #{vision_forward.1} parent=11 // pred_region
        %p145 = scmp.lt.s32.totalorder %s19, 0
        %s146 = scalar_select %p145, %s19, 0
        %s147 = smul.addr %s146, 4
        %s148 = scalar_lea.vmem %s1, %s147
      $region16: #{vision_forward.1} parent=11 // pred_fallthru
        _
      // Predicated region
      $region17: #{vision_forward.1} parent=11 // pred_check
        %p149 = pneg %p99
      $region18: #{vision_forward.1} parent=11 // pred_check_branch
        %151 = sbr.rel (%p149) target = $region20
      $region19: #{vision_forward.1} parent=11 // pred_region
        %p152 = scmp.lt.s32.totalorder %s19, 0
        %s153 = scalar_select %p152, %s19, 0
        %s154 = scalar_lea.vmem %s2, %s153
      $region20: #{vision_forward.1} parent=11 // pred_fallthru
        _
    $region12: #{vision_forward.1} parent=5 // pred_fallthru
      _
    %p155 = scmp.lt.s32.totalorder %s9, 2
    // Predicated region
    $region21: #{vision_forward.1} parent=5 // pred_check
      %p156 = pneg %p155
    $region22: #{vision_forward.1} parent=5 // pred_check_branch
      %158 = sbr.rel (%p156) target = $region24
    $region23: #{vision_forward.1} parent=5 // pred_region
      // Predicated region
      $region25: #{vision_forward.1} parent=23 // pred_check
        %p159 = pneg %p41
      $region26: #{vision_forward.1} parent=23 // pred_check_branch
        %161 = sbr.rel (%p159) target = $region28
      $region27: #{vision_forward.1} parent=23 // pred_region
        %p162 = scmp.lt.s32.totalorder %s16, 1
        %s163 = scalar_select %p162, %s16, 1
        %s164 = smul.addr %s163, 2
        %s165 = smul.addr %s164, 4
        %s166 = scalar_lea.vmem %s0, %s165
      $region28: #{vision_forward.1} parent=23 // pred_fallthru
        _
    $region24: #{vision_forward.1} parent=5 // pred_fallthru
      _
    %p167 = scmp.le.s32.totalorder 1, %s9
    %p168 = scmp.lt.s32.totalorder %s9, 3
    %p169 = pnand %p167, %p168
    %p170 = pneg %p169
    // Predicated region
    $region29: #{vision_forward.1} parent=5 // pred_check
      _
    $region30: #{vision_forward.1} parent=5 // pred_check_branch
      %172 = sbr.rel (%p169) target = $region32
    $region31: #{vision_forward.1} parent=5 // pred_region
      %s173 = ssub.s32 %s9, 1
      %p174 = scmp.lt.s32.totalorder %s18, 1
      %s175 = scalar_select %p174, %s18, 1
      %s176 = smul.addr %s175, 2
      %s177 = smul.addr %s176, 4
      %s178 = scalar_lea.vmem %s0, %s177
      %p179 = pneg %p47
      %p180 = pneg %p44
      %p181 = scmp.lt.s32.totalorder %s19, 0
      %s182 = scalar_select %p181, %s19, 0
      %s183 = smul.addr %s182, 4
      %s184 = scalar_lea.vmem %s1, %s183
      %p185 = pneg %p73
      %p186 = pneg %p70
      %p187 = scmp.lt.s32.totalorder %s19, 0
      %s188 = scalar_select %p187, %s19, 0
      %s189 = scalar_lea.vmem %s2, %s188
      %p190 = pneg %p99
      %p191 = pneg %p96
      %p192 = pneg %p127
      %p193 = pneg %p124
      %p194 = scmp.lt.s32.totalorder %s18, 1
      %s195 = scalar_select %p194, %s18, 1
      %p196 = scmp.lt.s32.totalorder %s19, 0
      %s197 = scalar_select %p196, %s19, 0
      %s198 = sadd.s32 %s197, %s195
      %s199 = smul.addr %s198, 8
      %s200 = scalar_lea.vmem %s3, %s199
      %p201 = scmp.lt.s32.totalorder %s18, 1
      %s202 = scalar_select %p201, %s18, 1
      %s203 = smul.addr %s202, 2
      %s204 = smul.addr %s203, 4
      %s205 = scalar_lea.vmem %s0, %s204
      %p206 = scmp.lt.s32.totalorder %s19, 0
      %s207 = scalar_select %p206, %s19, 0
      %s208 = smul.addr %s207, 4
      %s209 = scalar_lea.vmem %s1, %s208
      %p210 = scmp.lt.s32.totalorder %s19, 0
      %s211 = scalar_select %p210, %s19, 0
      %s212 = scalar_lea.vmem %s2, %s211
      %p213 = scmp.lt.s32.totalorder %s18, 1
      %s214 = scalar_select %p213, %s18, 1
      %p215 = scmp.lt.s32.totalorder %s19, 0
      %s216 = scalar_select %p215, %s19, 0
      %s217 = sadd.s32 %s216, %s214
      %s218 = smul.addr %s217, 8
      %s219 = scalar_lea.vmem %s3, %s218
      %v221 = vld [vmem:[%s205] sm:$0xff]
      %v222 = vld [vmem:[%s209] sm:$0xf]
      %v223 = vld [vmem:[%s209 + $0x4] sm:$0xf]
      %v224 = vld [vmem:[%s209 + $0x8] sm:$0xf]
      %v225 = vld [vmem:[%s209 + $0xc] sm:$0xf]
      %v226 = vld [vmem:[%s209 + $0x10] sm:$0xf]
      %v227 = vld [vmem:[%s209 + $0x14] sm:$0xf]
      %v228 = vld [vmem:[%s209 + $0x18] sm:$0xf]
      %v229 = vld [vmem:[%s209 + $0x1c] sm:$0xf]
      %v230 = vld [vmem:[%s209 + $0x20] sm:$0xf]
      %v231 = vld [vmem:[%s209 + $0x24] sm:$0xf]
      %v232 = vld [vmem:[%s209 + $0x28] sm:$0xf]
      %v233 = vld [vmem:[%s209 + $0x2c] sm:$0xf]
      %v234 = vld [vmem:[%s209 + $0x30] sm:$0xf]
      %v235 = vld [vmem:[%s209 + $0x34] sm:$0xf]
      %v236 = vld [vmem:[%s209 + $0x38] sm:$0xf]
      %v237 = vld [vmem:[%s209 + $0x3c] sm:$0xf]
      %v238 = vld [vmem:[%s209 + $0x40] sm:$0xf]
      %v239 = vld [vmem:[%s209 + $0x44] sm:$0xf]
      %v240 = vld [vmem:[%s209 + $0x48] sm:$0xf]
      %v241 = vld [vmem:[%s209 + $0x4c] sm:$0xf]
      %v242 = vld [vmem:[%s209 + $0x50] sm:$0xf]
      %v243 = vld [vmem:[%s209 + $0x54] sm:$0xf]
      %v244 = vld [vmem:[%s209 + $0x58] sm:$0xf]
      %v245 = vld [vmem:[%s209 + $0x5c] sm:$0xf]
      %v246 = vld [vmem:[%s209 + $0x60] sm:$0xf]
      %v247 = vld [vmem:[%s209 + $0x64] sm:$0xf]
      %v248 = vld [vmem:[%s209 + $0x68] sm:$0xf]
      %v249 = vld [vmem:[%s209 + $0x6c] sm:$0xf]
      %v250 = vld [vmem:[%s209 + $0x70] sm:$0xf]
      %v251 = vld [vmem:[%s209 + $0x74] sm:$0xf]
      %v252 = vld [vmem:[%s209 + $0x78] sm:$0xf]
      %v253 = vld [vmem:[%s209 + $0x7c] sm:$0xf]
      %v254 = vld [vmem:[%s212] sm:$0x1]
      %v256 = vlaneseq
      %v257 = vshrl.u32 %v256, 7
      %v258 = vsub.s32 0, %v257
      %v259 = vrot.slane %v254, %v258
      %v262 = vunpack.c.l.b16 %v221
      %v263 = vunpack.c.h.b16 %v221
      %v264 = vpack.c.b16 %v262, %v262
      %v265 = vpack.c.b16 %v263, %v263
      %v300 = vunpack.c.l.b16 %v222
      %v301 = vunpack.c.l.b16 %v223
      %v302 = vunpack.c.l.b16 %v224
      %v303 = vunpack.c.l.b16 %v225
      %v304 = vunpack.c.l.b16 %v226
      %v305 = vunpack.c.l.b16 %v227
      %v306 = vunpack.c.l.b16 %v228
      %v307 = vunpack.c.l.b16 %v229
      %v308 = vunpack.c.l.b16 %v230
      %v309 = vunpack.c.l.b16 %v231
      %v310 = vunpack.c.l.b16 %v232
      %v311 = vunpack.c.l.b16 %v233
      %v312 = vunpack.c.l.b16 %v234
      %v313 = vunpack.c.l.b16 %v235
      %v314 = vunpack.c.l.b16 %v236
      %v315 = vunpack.c.l.b16 %v237
      %v316 = vunpack.c.l.b16 %v238
      %v317 = vunpack.c.l.b16 %v239
      %v318 = vunpack.c.l.b16 %v240
      %v319 = vunpack.c.l.b16 %v241
      %v320 = vunpack.c.l.b16 %v242
      %v321 = vunpack.c.l.b16 %v243
      %v322 = vunpack.c.l.b16 %v244
      %v323 = vunpack.c.l.b16 %v245
      %v324 = vunpack.c.l.b16 %v246
      %v325 = vunpack.c.l.b16 %v247
      %v326 = vunpack.c.l.b16 %v248
      %v327 = vunpack.c.l.b16 %v249
      %v328 = vunpack.c.l.b16 %v250
      %v329 = vunpack.c.l.b16 %v251
      %v330 = vunpack.c.l.b16 %v252
      %v331 = vunpack.c.l.b16 %v253
      %v332 = vpack.c.b16 %v301, %v300
      %v333 = vpack.c.b16 %v303, %v302
      %v334 = vpack.c.b16 %v305, %v304
      %v335 = vpack.c.b16 %v307, %v306
      %v336 = vpack.c.b16 %v309, %v308
      %v337 = vpack.c.b16 %v311, %v310
      %v338 = vpack.c.b16 %v313, %v312
      %v339 = vpack.c.b16 %v315, %v314
      %v340 = vpack.c.b16 %v317, %v316
      %v341 = vpack.c.b16 %v319, %v318
      %v342 = vpack.c.b16 %v321, %v320
      %v343 = vpack.c.b16 %v323, %v322
      %v344 = vpack.c.b16 %v325, %v324
      %v345 = vpack.c.b16 %v327, %v326
      %v346 = vpack.c.b16 %v329, %v328
      %v347 = vpack.c.b16 %v331, %v330
      %364 = vmatprep.subr.bf16.mxu0 0
      %365 = vmatpush1.bf16.msra.mxu0 %v332
      %366 = vmatprep.subr.bf16.mxu0 0
      %367 = vmatpush1.bf16.msra.mxu0 %v333
      %368 = vmatprep.subr.bf16.mxu0 0
      %369 = vmatpush1.bf16.msra.mxu0 %v334
      %370 = vmatprep.subr.bf16.mxu0 0
      %371 = vmatpush1.bf16.msra.mxu0 %v335
      %372 = vmatprep.subr.bf16.mxu0 0
      %373 = vmatpush1.bf16.msra.mxu0 %v336
      %374 = vmatprep.subr.bf16.mxu0 0
      %375 = vmatpush1.bf16.msra.mxu0 %v337
      %376 = vmatprep.subr.bf16.mxu0 0
      %377 = vmatpush1.bf16.msra.mxu0 %v338
      %378 = vmatprep.subr.bf16.mxu0 0
      %379 = vmatpush1.bf16.msra.mxu0 %v339
      %380 = vmatprep.subr.bf16.mxu0 0
      %381 = vmatpush1.bf16.msra.mxu0 %v340
      %382 = vmatprep.subr.bf16.mxu0 0
      %383 = vmatpush1.bf16.msra.mxu0 %v341
      %384 = vmatprep.subr.bf16.mxu0 0
      %385 = vmatpush1.bf16.msra.mxu0 %v342
      %386 = vmatprep.subr.bf16.mxu0 0
      %387 = vmatpush1.bf16.msra.mxu0 %v343
      %388 = vmatprep.subr.bf16.mxu0 0
      %389 = vmatpush1.bf16.msra.mxu0 %v344
      %390 = vmatprep.subr.bf16.mxu0 0
      %391 = vmatpush1.bf16.msra.mxu0 %v345
      %392 = vmatprep.subr.bf16.mxu0 0
      %393 = vmatpush1.bf16.msra.mxu0 %v346
      %394 = vmatprep.subr.bf16.mxu0 0
      %395 = vmatpush1.bf16.msra.mxu0 %v347
      %396 = vmatprep.mubr.bf16.mxu0 %v265
      %397 = vmatmul.mubr.bf16.gmra.mrb[0].mxu0 %v264
      %v398 = vpop.f32.mrb[0].mxu0
      %v399 = vadd.f32 %v259, %v398
      %v400 = vpop.f32.mrb[0].mxu0
      %v401 = vpop.f32.mrb[0].mxu0
      %v402 = vpop.f32.mrb[0].mxu0
      %403 = vdwg.mxu0
      %404 = vst [vmem:[%s219] sm:$0xff] %v399
      %p405 = scmp.lt.s32.totalorder %s18, 1
      %s406 = scalar_select %p405, %s18, 1
      %p407 = scmp.lt.s32.totalorder %s19, 0
      %s408 = scalar_select %p407, %s19, 0
      %s409 = sadd.s32 %s408, %s406
      %s410 = smul.addr %s409, 8
      %s411 = scalar_lea.vmem %s3, %s410
      // Predicated region
      $region33: #{vision_forward.1} parent=31 // pred_check
        %p412 = pneg %p124
      $region34: #{vision_forward.1} parent=31 // pred_check_branch
        %414 = sbr.rel (%p412) target = $region36
      $region35: #{vision_forward.1} parent=31 // pred_region
        _
      $region36: #{vision_forward.1} parent=31 // pred_fallthru
        _
    $region32: #{vision_forward.1} parent=5 // pred_fallthru
      _
    %p415 = scmp.le.s32.totalorder 2, %s9
    // Predicated region
    $region37: #{vision_forward.1} parent=5 // pred_check
      %p416 = pneg %p415
    $region38: #{vision_forward.1} parent=5 // pred_check_branch
      %418 = sbr.rel (%p416) target = $region40
    $region39: #{vision_forward.1} parent=5 // pred_region
      %s419 = ssub.s32 %s9, 2
      // Predicated region
      $region41: #{vision_forward.1} parent=39 // pred_check
        %p420 = pneg %p130
      $region42: #{vision_forward.1} parent=39 // pred_check_branch
        %422 = sbr.rel (%p420) target = $region44
      $region43: #{vision_forward.1} parent=39 // pred_region
        %p423 = scmp.lt.s32.totalorder %s20, 1
        %s424 = scalar_select %p423, %s20, 1
        %p425 = scmp.lt.s32.totalorder %s21, 0
        %s426 = scalar_select %p425, %s21, 0
        %s427 = sadd.s32 %s426, %s424
        %s428 = smul.addr %s427, 8
        %s429 = scalar_lea.vmem %s3, %s428
      $region44: #{vision_forward.1} parent=39 // pred_fallthru
        _
    $region40: #{vision_forward.1} parent=5 // pred_fallthru
      _
  $region6: #{vision_forward.1} parent=0 // loop_footer
    %s13 = sadd.s32 1, %s9
  $region7: #{vision_forward.1} parent=0 // loop_footer_branch
    %8 = sbr.rel target = $region3
  $region8: #{vision_forward.1} parent=0 // loop_exit
    _

</llo_original>
